<compile_context>
chip_gen: v6e
topology: v6e:2x2x1
jax: 0.10.0
libtpu: 0.0.40
codegen_flags: <defaults>
</compile_context>

<pallas_src>
import functools

import jax
import jax.numpy as jnp
from jax import lax
from jax.experimental import pallas as pl
from jax.experimental.pallas import tpu as pltpu


def _round_up(x, m):
    return ((x + m - 1) // m) * m


def _vmem_capacity_bytes():
    """Physical per-core VMEM; conservative (v7x-sized) fallback if unqueryable."""
    try:
        cap = getattr(pltpu.get_tpu_info(), "vmem_capacity_bytes", None)
        if cap:
            return int(cap)
    except Exception:
        pass
    return 64 * 1024 * 1024


def _num_tensorcores():
    """TensorCores a single Pallas grid can shard a 'parallel' axis across."""
    try:
        dev = jax.devices()[0]
        nc = getattr(dev, "num_cores", None)
        if nc:
            return max(1, min(2, int(nc)))
        kind = str(getattr(dev, "device_kind", "")).lower()
        if any(tag in kind for tag in ("v4", "v5p", "v7", "tpu7")):
            return 2
    except Exception:
        pass
    return 1


def _rnn_kernel(wrec_ref, drive_ref, out_ref, state_ref, *, beta, unroll):
    """One (batch-block, time-chunk) grid step of the leaky-ReLU recurrence.

    wrec_ref : (n_pad, n_pad)  bf16  alpha * W_rec.T, zero padded (VMEM-resident)
    drive_ref: (Kt, Bb, n_pad) bf16  alpha*(u @ W_in.T + noise), shifted +1 step
    out_ref  : (Kt, Bb, n_pad) bf16  states chunk (time-major)
    state_ref: (Bb, n_pad)     f32   hidden state carried across time chunks
    """
    # First time-chunk of each batch block: reset the carried state to zero.
    @pl.when(pl.program_id(1) == 0)
    def _():
        state_ref[...] = jnp.zeros_like(state_ref)

    w = wrec_ref[...]                 # bf16, stays resident across all steps
    kt = drive_ref.shape[0]

    # TODO(synk): if bundle dumps show the identical RHS being re-pushed to the
    # MXU every step, switch to pltpu.matmul_push_rhs / matmul_acc_lhs /
    # matmul_pop to keep W_rec stationary across the time loop.
    def body(j, st):
        # bf16 MXU operands, f32 accumulate; carried state + VPU math stay f32.
        pre = jnp.dot(st.astype(w.dtype), w, preferred_element_type=jnp.float32)
        pre = pre + drive_ref[j].astype(jnp.float32)
        new = beta * st + jnp.maximum(pre, 0.0)
        out_ref[j] = new.astype(out_ref.dtype)
        return new

    state_ref[...] = lax.fori_loop(0, kt, body, state_ref[...], unroll=unroll)


def net_forward(u, noise_scaled, w_rec, w_in, *, alpha, max_time_chunk=512):
    """Pallas forward pass of `Net`.

    u:            (B, T, input_size)
    noise_scaled: (B, T, n)  already multiplied by sqrt(2*alpha*sigma_rec**2)
    w_rec:        (n, n)             recurrent_layer.weight
    w_in:         (n, input_size)    input_layer.weight
    Returns states (B, T, n) float32 with states[:, 0, :] == 0.
    """
    assert alpha > 0.0, "alpha is folded through the ReLU; requires alpha > 0"
    alpha = float(alpha)
    beta = 1.0 - alpha

    B, T, _ = u.shape
    n = w_rec.shape[0]
    f32, bf16 = jnp.float32, jnp.bfloat16

    # ---- lane/sublane-dense padded sizes (bf16 streams => 16-row granules) --
    n_pad = _round_up(max(n, 128), 128)     # lane-dense last dim
    sub = 16                                # bf16 packed sublane granule
    B_pad = _round_up(max(B, sub), sub)

    # ---- generation-aware batch blocking ------------------------------------
    n_cores = _num_tensorcores()
    # One block per TensorCore (2 on v7x, 1 on v5e/v6e), capped so the f32
    # carried state stays ~<= 32 vregs (avoid spilling on the serial path).
    carry_cap_elems = 32 * 1024
    bb_cap = max(sub, (carry_cap_elems // n_pad) // sub * sub)
    Bb = max(sub, min(_round_up(pl.cdiv(B_pad, n_cores), sub), bb_cap))

    # ---- weight-aware, generation-aware VMEM budget -> time-chunk depth Kt --
    vmem_limit = min(int(_vmem_capacity_bytes() * 0.7), 96 * 1024 * 1024)
    while True:
        avail = (vmem_limit
                 - 2 * (n_pad * n_pad * 2)      # bf16 weight, assume 2 buffers
                 - Bb * n_pad * 4               # f32 carried-state scratch
                 - (2 << 20))                   # compiler scratch slack
        per_step = 2 * 2 * (Bb * n_pad * 2)     # (drive-in + states-out) bf16,
        #                                         each double-buffered
        Kt = int(max(1, min(T, max_time_chunk, avail // per_step)))
        if Kt >= min(8, T) or Bb <= sub:
            break
        Bb = max(sub, ((Bb // 2) // sub) * sub)  # shrink batch block, retry
    B_pad = _round_up(B_pad, Bb)
    T_pad = _round_up(T, Kt)

    # ---- parameters ----------------------------------------------------------
    w_in = w_in.astype(f32)
    # alpha * W_rec.T as bf16, zero-padded to (n_pad, n_pad)
    wrec_t = jnp.pad((alpha * w_rec.astype(f32).T).astype(bf16),
                     ((0, n_pad - n), (0, n_pad - n)))

    # ---- hoist input projection out of the serial loop, directly time-major --
    # drive[t] = alpha * (u[:, t] @ W_in.T + noise[:, t]); fused einsum epilogue
    # (scale + noise add + bf16 cast), then one pad that also folds in the
    # +1-step shift (drive[0] = 0, so states[0] = 0 falls out of the uniform
    # update with zero init).  Padded rows/lanes/steps stay exactly zero.
    u_tm = jnp.swapaxes(u.astype(f32), 0, 1)                  # (T, B, in) tiny
    noise_tm = jnp.swapaxes(noise_scaled.astype(f32), 0, 1)   # (T, B, n)
    drive = (alpha * (jnp.einsum("tbi,ni->tbn", u_tm, w_in,
                                 preferred_element_type=f32)
                      + noise_tm)).astype(bf16)
    drive_tm = jnp.pad(drive[: T - 1],
                       ((1, T_pad - T), (0, B_pad - B), (0, n_pad - n)))

    grid = (B_pad // Bb, T_pad // Kt)
    unroll = int(min(Kt, 8 if Bb * n_pad <= 16 * 1024 else 4))
    kernel = functools.partial(_rnn_kernel, beta=beta, unroll=unroll)

    states_tm = pl.pallas_call(
        kernel,
        out_shape=jax.ShapeDtypeStruct((T_pad, B_pad, n_pad), bf16),
        grid_spec=pltpu.PrefetchScalarGridSpec(
            num_scalar_prefetch=0,
            grid=grid,
            in_specs=[
                pl.BlockSpec((n_pad, n_pad), lambda b, t: (0, 0)),
                pl.BlockSpec((Kt, Bb, n_pad), lambda b, t: (t, b, 0)),
            ],
            out_specs=pl.BlockSpec((Kt, Bb, n_pad), lambda b, t: (t, b, 0)),
            scratch_shapes=[pltpu.VMEM((Bb, n_pad), f32)],
        ),
        compiler_params=pltpu.CompilerParams(
            dimension_semantics=("parallel", "arbitrary"),
            vmem_limit_bytes=int(vmem_limit),
        ),
    )(wrec_t, drive_tm)

    # (T,B,n) -> PyTorch's (B,T,n): one fused slice + transpose + f32 cast,
    # off the serial critical path (and half-width read thanks to bf16 states).
    return jnp.swapaxes(states_tm[:T, :B, :n], 0, 1).astype(f32)


def _reference_forward(u, noise_scaled, w_rec, w_in, alpha):
    """Pure-JAX f32 reference mirroring the PyTorch loop."""
    B, T, _ = u.shape
    n = w_rec.shape[0]
    states = [jnp.zeros((B, n), jnp.float32)]
    for i in range(T - 1):
        pre = states[i] @ w_rec.T + u[:, i, :] @ w_in.T + noise_scaled[:, i, :]
        states.append((1.0 - alpha) * states[i] + alpha * jnp.maximum(pre, 0.0))
    return jnp.stack(states, axis=1)


if __name__ == "__main__":
    # Small shapes consistent with the module: n hidden units, input_size=6.
    B, T = 2, 8
    n, input_size = 32, 6
    alpha, sigma_rec = 0.2, 0.15

    key = jax.random.PRNGKey(0)
    k_u, k_rec, k_in, k_noise = jax.random.split(key, 4)

    # Deterministic parameter init (shapes per nn.Linear in __init__):
    #  - recurrent_layer.weight: (n, n) ~ U(-1/sqrt(n), 1/sqrt(n))
    #  - input_layer.weight: (n, input_size) ~ N(0.1, 0.01), relu'd by
    #    connectivity_constraints()
    bound = 1.0 / jnp.sqrt(jnp.float32(n))
    w_rec = jax.random.uniform(k_rec, (n, n), jnp.float32, -bound, bound)
    w_in = jnp.maximum(
        0.1 + 0.01 * jax.random.normal(k_in, (n, input_size), jnp.float32), 0.0
    )

    u = jax.random.normal(k_u, (B, T, input_size), jnp.float32)

    # noise = sqrt(2*alpha*sigma_rec^2) * N(0, 1), shape (B, T, n)
    # TODO(synk): torch.empty().normal_ RNG stream cannot be reproduced exactly;
    # an equivalent-distribution noise tensor is passed in instead.
    noise_scale = jnp.sqrt(2.0 * alpha * sigma_rec**2)
    noise_scaled = noise_scale * jax.random.normal(k_noise, (B, T, n), jnp.float32)

    fwd = jax.jit(lambda u_, nz_, wr_, wi_: net_forward(u_, nz_, wr_, wi_,
                                                        alpha=alpha))
    states = jax.block_until_ready(fwd(u, noise_scaled, w_rec, w_in))

    ref = _reference_forward(u, noise_scaled, w_rec, w_in, alpha)
    assert states.shape == (B, T, n)
    assert states.dtype == jnp.float32
    # bf16 MXU operands / bf16 state stream => slightly looser tolerance than
    # the all-f32 path; dynamics are noise-injected so this is well within use.
    assert jnp.allclose(states, ref, atol=5e-3, rtol=1e-2)

    print("KERNEL_OK")
</pallas_src>

<mosaic_0001>
module attributes {stable_mosaic.version = 11 : i64} {
  func.func @_rnn_kernel(%arg0: i32, %arg1: i32, %arg2: memref<128x128xbf16, #tpu.memory_space<vmem>>, %arg3: memref<8x16x128xbf16, #tpu.memory_space<vmem>>, %arg4: memref<8x16x128xbf16, #tpu.memory_space<vmem>>, %arg5: memref<16x128xf32, #tpu.memory_space<vmem>>) attributes {dimension_semantics = [#tpu.dimension_semantics<parallel>, #tpu.dimension_semantics<arbitrary>], iteration_bounds = array<i64: 1, 1>, scalar_prefetch = 0 : i64, scratch_operands = 1 : i64, tpu.core_type = #tpu.core_type<tc>, window_params = [{pipeline_mode = #tpu.pipeline_mode<synchronous>, transform_indices = @transform_0, window_bounds = array<i64: 128, 128>}, {transform_indices = @transform_1, window_bounds = array<i64: 8, 16, 128>}, {transform_indices = @transform_2, window_bounds = array<i64: 8, 16, 128>}]} {
    %c0_i32 = arith.constant 0 : i32
    %0 = arith.cmpi eq, %arg1, %c0_i32 : i32
    %1 = arith.extui %0 : i1 to i32
    %c0_i32_0 = arith.constant 0 : i32
    %2 = arith.cmpi ne, %1, %c0_i32_0 : i32
    scf.if %2 {
      %cst_62 = arith.constant 0.000000e+00 : f32
      %142 = vector.broadcast %cst_62 : f32 to vector<16x128xf32>
      %c0_63 = arith.constant 0 : index
      %c0_64 = arith.constant 0 : index
      %143 = vector.load %arg5[%c0_63, %c0_64] : memref<16x128xf32, #tpu.memory_space<vmem>>, vector<16x128xf32>
      tpu.vector_store %arg5[%c0_63, %c0_64], %142 {strides = array<i32>} : memref<16x128xf32, #tpu.memory_space<vmem>>, vector<16x128xf32>,
    } else {
    }
    %c0 = arith.constant 0 : index
    %c0_1 = arith.constant 0 : index
    %3 = vector.load %arg2[%c0, %c0_1] : memref<128x128xbf16, #tpu.memory_space<vmem>>, vector<128x128xbf16>
    %c0_2 = arith.constant 0 : index
    %c0_3 = arith.constant 0 : index
    %4 = vector.load %arg5[%c0_2, %c0_3] : memref<16x128xf32, #tpu.memory_space<vmem>>, vector<16x128xf32>
    %c0_i32_4 = arith.constant 0 : i32
    %5 = arith.truncf %4 : vector<16x128xf32> to vector<16x128xbf16>
    %cst = arith.constant dense<0.000000e+00> : vector<16x128xf32>
    %6 = tpu.matmul %5, %3, %cst {dimension_numbers = #tpu.dot_dimension_numbers<[1], [0], [0], [1], [0, 0, 1, 1], [], []>} : vector<16x128xbf16>, vector<128x128xbf16>, vector<16x128xf32> -> vector<16x128xf32>
    %7 = arith.index_cast %c0_i32_4 : i32 to index
    %c0_5 = arith.constant 0 : index
    %c0_6 = arith.constant 0 : index
    %8 = vector.load %arg3[%7, %c0_5, %c0_6] : memref<8x16x128xbf16, #tpu.memory_space<vmem>>, vector<1x16x128xbf16>
    %9 = vector.shape_cast %8 : vector<1x16x128xbf16> to vector<16x128xbf16>
    %10 = arith.extf %9 : vector<16x128xbf16> to vector<16x128xf32>
    %11 = arith.addf %6, %10 : vector<16x128xf32>
    %cst_7 = arith.constant 8.000000e-01 : f32
    %12 = vector.broadcast %cst_7 : f32 to vector<16x128xf32>
    %13 = arith.mulf %12, %4 : vector<16x128xf32>
    %cst_8 = arith.constant 0.000000e+00 : f32
    %14 = vector.broadcast %cst_8 : f32 to vector<16x128xf32>
    %15 = arith.maximumf %11, %14 : vector<16x128xf32>
    %16 = arith.addf %13, %15 : vector<16x128xf32>
    %17 = arith.truncf %16 : vector<16x128xf32> to vector<16x128xbf16>
    %18 = arith.index_cast %c0_i32_4 : i32 to index
    %c0_9 = arith.constant 0 : index
    %c0_10 = arith.constant 0 : index
    %19 = vector.load %arg4[%18, %c0_9, %c0_10] : memref<8x16x128xbf16, #tpu.memory_space<vmem>>, vector<1x16x128xbf16>
    %20 = vector.shape_cast %19 : vector<1x16x128xbf16> to vector<16x128xbf16>
    %21 = vector.shape_cast %17 : vector<16x128xbf16> to vector<1x16x128xbf16>
    tpu.vector_store %arg4[%18, %c0_9, %c0_10], %21 {strides = array<i32>} : memref<8x16x128xbf16, #tpu.memory_space<vmem>>, vector<1x16x128xbf16>,
    %c1_i32 = arith.constant 1 : i32
    %22 = arith.truncf %16 : vector<16x128xf32> to vector<16x128xbf16>
    %cst_11 = arith.constant dense<0.000000e+00> : vector<16x128xf32>
    %23 = tpu.matmul %22, %3, %cst_11 {dimension_numbers = #tpu.dot_dimension_numbers<[1], [0], [0], [1], [0, 0, 1, 1], [], []>} : vector<16x128xbf16>, vector<128x128xbf16>, vector<16x128xf32> -> vector<16x128xf32>
    %24 = arith.index_cast %c1_i32 : i32 to index
    %c0_12 = arith.constant 0 : index
    %c0_13 = arith.constant 0 : index
    %25 = vector.load %arg3[%24, %c0_12, %c0_13] : memref<8x16x128xbf16, #tpu.memory_space<vmem>>, vector<1x16x128xbf16>
    %26 = vector.shape_cast %25 : vector<1x16x128xbf16> to vector<16x128xbf16>
    %27 = arith.extf %26 : vector<16x128xbf16> to vector<16x128xf32>
    %28 = arith.addf %23, %27 : vector<16x128xf32>
    %cst_14 = arith.constant 8.000000e-01 : f32
    %29 = vector.broadcast %cst_14 : f32 to vector<16x128xf32>
    %30 = arith.mulf %29, %16 : vector<16x128xf32>
    %cst_15 = arith.constant 0.000000e+00 : f32
    %31 = vector.broadcast %cst_15 : f32 to vector<16x128xf32>
    %32 = arith.maximumf %28, %31 : vector<16x128xf32>
    %33 = arith.addf %30, %32 : vector<16x128xf32>
    %34 = arith.truncf %33 : vector<16x128xf32> to vector<16x128xbf16>
    %35 = arith.index_cast %c1_i32 : i32 to index
    %c0_16 = arith.constant 0 : index
    %c0_17 = arith.constant 0 : index
    %36 = vector.load %arg4[%35, %c0_16, %c0_17] : memref<8x16x128xbf16, #tpu.memory_space<vmem>>, vector<1x16x128xbf16>
    %37 = vector.shape_cast %36 : vector<1x16x128xbf16> to vector<16x128xbf16>
    %38 = vector.shape_cast %34 : vector<16x128xbf16> to vector<1x16x128xbf16>
    tpu.vector_store %arg4[%35, %c0_16, %c0_17], %38 {strides = array<i32>} : memref<8x16x128xbf16, #tpu.memory_space<vmem>>, vector<1x16x128xbf16>,
    %c2_i32 = arith.constant 2 : i32
    %39 = arith.truncf %33 : vector<16x128xf32> to vector<16x128xbf16>
    %cst_18 = arith.constant dense<0.000000e+00> : vector<16x128xf32>
    %40 = tpu.matmul %39, %3, %cst_18 {dimension_numbers = #tpu.dot_dimension_numbers<[1], [0], [0], [1], [0, 0, 1, 1], [], []>} : vector<16x128xbf16>, vector<128x128xbf16>, vector<16x128xf32> -> vector<16x128xf32>
    %41 = arith.index_cast %c2_i32 : i32 to index
    %c0_19 = arith.constant 0 : index
    %c0_20 = arith.constant 0 : index
    %42 = vector.load %arg3[%41, %c0_19, %c0_20] : memref<8x16x128xbf16, #tpu.memory_space<vmem>>, vector<1x16x128xbf16>
    %43 = vector.shape_cast %42 : vector<1x16x128xbf16> to vector<16x128xbf16>
    %44 = arith.extf %43 : vector<16x128xbf16> to vector<16x128xf32>
    %45 = arith.addf %40, %44 : vector<16x128xf32>
    %cst_21 = arith.constant 8.000000e-01 : f32
    %46 = vector.broadcast %cst_21 : f32 to vector<16x128xf32>
    %47 = arith.mulf %46, %33 : vector<16x128xf32>
    %cst_22 = arith.constant 0.000000e+00 : f32
    %48 = vector.broadcast %cst_22 : f32 to vector<16x128xf32>
    %49 = arith.maximumf %45, %48 : vector<16x128xf32>
    %50 = arith.addf %47, %49 : vector<16x128xf32>
    %51 = arith.truncf %50 : vector<16x128xf32> to vector<16x128xbf16>
    %52 = arith.index_cast %c2_i32 : i32 to index
    %c0_23 = arith.constant 0 : index
    %c0_24 = arith.constant 0 : index
    %53 = vector.load %arg4[%52, %c0_23, %c0_24] : memref<8x16x128xbf16, #tpu.memory_space<vmem>>, vector<1x16x128xbf16>
    %54 = vector.shape_cast %53 : vector<1x16x128xbf16> to vector<16x128xbf16>
    %55 = vector.shape_cast %51 : vector<16x128xbf16> to vector<1x16x128xbf16>
    tpu.vector_store %arg4[%52, %c0_23, %c0_24], %55 {strides = array<i32>} : memref<8x16x128xbf16, #tpu.memory_space<vmem>>, vector<1x16x128xbf16>,
    %c3_i32 = arith.constant 3 : i32
    %56 = arith.truncf %50 : vector<16x128xf32> to vector<16x128xbf16>
    %cst_25 = arith.constant dense<0.000000e+00> : vector<16x128xf32>
    %57 = tpu.matmul %56, %3, %cst_25 {dimension_numbers = #tpu.dot_dimension_numbers<[1], [0], [0], [1], [0, 0, 1, 1], [], []>} : vector<16x128xbf16>, vector<128x128xbf16>, vector<16x128xf32> -> vector<16x128xf32>
    %58 = arith.index_cast %c3_i32 : i32 to index
    %c0_26 = arith.constant 0 : index
    %c0_27 = arith.constant 0 : index
    %59 = vector.load %arg3[%58, %c0_26, %c0_27] : memref<8x16x128xbf16, #tpu.memory_space<vmem>>, vector<1x16x128xbf16>
    %60 = vector.shape_cast %59 : vector<1x16x128xbf16> to vector<16x128xbf16>
    %61 = arith.extf %60 : vector<16x128xbf16> to vector<16x128xf32>
    %62 = arith.addf %57, %61 : vector<16x128xf32>
    %cst_28 = arith.constant 8.000000e-01 : f32
    %63 = vector.broadcast %cst_28 : f32 to vector<16x128xf32>
    %64 = arith.mulf %63, %50 : vector<16x128xf32>
    %cst_29 = arith.constant 0.000000e+00 : f32
    %65 = vector.broadcast %cst_29 : f32 to vector<16x128xf32>
    %66 = arith.maximumf %62, %65 : vector<16x128xf32>
    %67 = arith.addf %64, %66 : vector<16x128xf32>
    %68 = arith.truncf %67 : vector<16x128xf32> to vector<16x128xbf16>
    %69 = arith.index_cast %c3_i32 : i32 to index
    %c0_30 = arith.constant 0 : index
    %c0_31 = arith.constant 0 : index
    %70 = vector.load %arg4[%69, %c0_30, %c0_31] : memref<8x16x128xbf16, #tpu.memory_space<vmem>>, vector<1x16x128xbf16>
    %71 = vector.shape_cast %70 : vector<1x16x128xbf16> to vector<16x128xbf16>
    %72 = vector.shape_cast %68 : vector<16x128xbf16> to vector<1x16x128xbf16>
    tpu.vector_store %arg4[%69, %c0_30, %c0_31], %72 {strides = array<i32>} : memref<8x16x128xbf16, #tpu.memory_space<vmem>>, vector<1x16x128xbf16>,
    %c4_i32 = arith.constant 4 : i32
    %73 = arith.truncf %67 : vector<16x128xf32> to vector<16x128xbf16>
    %cst_32 = arith.constant dense<0.000000e+00> : vector<16x128xf32>
    %74 = tpu.matmul %73, %3, %cst_32 {dimension_numbers = #tpu.dot_dimension_numbers<[1], [0], [0], [1], [0, 0, 1, 1], [], []>} : vector<16x128xbf16>, vector<128x128xbf16>, vector<16x128xf32> -> vector<16x128xf32>
    %75 = arith.index_cast %c4_i32 : i32 to index
    %c0_33 = arith.constant 0 : index
    %c0_34 = arith.constant 0 : index
    %76 = vector.load %arg3[%75, %c0_33, %c0_34] : memref<8x16x128xbf16, #tpu.memory_space<vmem>>, vector<1x16x128xbf16>
    %77 = vector.shape_cast %76 : vector<1x16x128xbf16> to vector<16x128xbf16>
    %78 = arith.extf %77 : vector<16x128xbf16> to vector<16x128xf32>
    %79 = arith.addf %74, %78 : vector<16x128xf32>
    %cst_35 = arith.constant 8.000000e-01 : f32
    %80 = vector.broadcast %cst_35 : f32 to vector<16x128xf32>
    %81 = arith.mulf %80, %67 : vector<16x128xf32>
    %cst_36 = arith.constant 0.000000e+00 : f32
    %82 = vector.broadcast %cst_36 : f32 to vector<16x128xf32>
    %83 = arith.maximumf %79, %82 : vector<16x128xf32>
    %84 = arith.addf %81, %83 : vector<16x128xf32>
    %85 = arith.truncf %84 : vector<16x128xf32> to vector<16x128xbf16>
    %86 = arith.index_cast %c4_i32 : i32 to index
    %c0_37 = arith.constant 0 : index
    %c0_38 = arith.constant 0 : index
    %87 = vector.load %arg4[%86, %c0_37, %c0_38] : memref<8x16x128xbf16, #tpu.memory_space<vmem>>, vector<1x16x128xbf16>
    %88 = vector.shape_cast %87 : vector<1x16x128xbf16> to vector<16x128xbf16>
    %89 = vector.shape_cast %85 : vector<16x128xbf16> to vector<1x16x128xbf16>
    tpu.vector_store %arg4[%86, %c0_37, %c0_38], %89 {strides = array<i32>} : memref<8x16x128xbf16, #tpu.memory_space<vmem>>, vector<1x16x128xbf16>,
    %c5_i32 = arith.constant 5 : i32
    %90 = arith.truncf %84 : vector<16x128xf32> to vector<16x128xbf16>
    %cst_39 = arith.constant dense<0.000000e+00> : vector<16x128xf32>
    %91 = tpu.matmul %90, %3, %cst_39 {dimension_numbers = #tpu.dot_dimension_numbers<[1], [0], [0], [1], [0, 0, 1, 1], [], []>} : vector<16x128xbf16>, vector<128x128xbf16>, vector<16x128xf32> -> vector<16x128xf32>
    %92 = arith.index_cast %c5_i32 : i32 to index
    %c0_40 = arith.constant 0 : index
    %c0_41 = arith.constant 0 : index
    %93 = vector.load %arg3[%92, %c0_40, %c0_41] : memref<8x16x128xbf16, #tpu.memory_space<vmem>>, vector<1x16x128xbf16>
    %94 = vector.shape_cast %93 : vector<1x16x128xbf16> to vector<16x128xbf16>
    %95 = arith.extf %94 : vector<16x128xbf16> to vector<16x128xf32>
    %96 = arith.addf %91, %95 : vector<16x128xf32>
    %cst_42 = arith.constant 8.000000e-01 : f32
    %97 = vector.broadcast %cst_42 : f32 to vector<16x128xf32>
    %98 = arith.mulf %97, %84 : vector<16x128xf32>
    %cst_43 = arith.constant 0.000000e+00 : f32
    %99 = vector.broadcast %cst_43 : f32 to vector<16x128xf32>
    %100 = arith.maximumf %96, %99 : vector<16x128xf32>
    %101 = arith.addf %98, %100 : vector<16x128xf32>
    %102 = arith.truncf %101 : vector<16x128xf32> to vector<16x128xbf16>
    %103 = arith.index_cast %c5_i32 : i32 to index
    %c0_44 = arith.constant 0 : index
    %c0_45 = arith.constant 0 : index
    %104 = vector.load %arg4[%103, %c0_44, %c0_45] : memref<8x16x128xbf16, #tpu.memory_space<vmem>>, vector<1x16x128xbf16>
    %105 = vector.shape_cast %104 : vector<1x16x128xbf16> to vector<16x128xbf16>
    %106 = vector.shape_cast %102 : vector<16x128xbf16> to vector<1x16x128xbf16>
    tpu.vector_store %arg4[%103, %c0_44, %c0_45], %106 {strides = array<i32>} : memref<8x16x128xbf16, #tpu.memory_space<vmem>>, vector<1x16x128xbf16>,
    %c6_i32 = arith.constant 6 : i32
    %107 = arith.truncf %101 : vector<16x128xf32> to vector<16x128xbf16>
    %cst_46 = arith.constant dense<0.000000e+00> : vector<16x128xf32>
    %108 = tpu.matmul %107, %3, %cst_46 {dimension_numbers = #tpu.dot_dimension_numbers<[1], [0], [0], [1], [0, 0, 1, 1], [], []>} : vector<16x128xbf16>, vector<128x128xbf16>, vector<16x128xf32> -> vector<16x128xf32>
    %109 = arith.index_cast %c6_i32 : i32 to index
    %c0_47 = arith.constant 0 : index
    %c0_48 = arith.constant 0 : index
    %110 = vector.load %arg3[%109, %c0_47, %c0_48] : memref<8x16x128xbf16, #tpu.memory_space<vmem>>, vector<1x16x128xbf16>
    %111 = vector.shape_cast %110 : vector<1x16x128xbf16> to vector<16x128xbf16>
    %112 = arith.extf %111 : vector<16x128xbf16> to vector<16x128xf32>
    %113 = arith.addf %108, %112 : vector<16x128xf32>
    %cst_49 = arith.constant 8.000000e-01 : f32
    %114 = vector.broadcast %cst_49 : f32 to vector<16x128xf32>
    %115 = arith.mulf %114, %101 : vector<16x128xf32>
    %cst_50 = arith.constant 0.000000e+00 : f32
    %116 = vector.broadcast %cst_50 : f32 to vector<16x128xf32>
    %117 = arith.maximumf %113, %116 : vector<16x128xf32>
    %118 = arith.addf %115, %117 : vector<16x128xf32>
    %119 = arith.truncf %118 : vector<16x128xf32> to vector<16x128xbf16>
    %120 = arith.index_cast %c6_i32 : i32 to index
    %c0_51 = arith.constant 0 : index
    %c0_52 = arith.constant 0 : index
    %121 = vector.load %arg4[%120, %c0_51, %c0_52] : memref<8x16x128xbf16, #tpu.memory_space<vmem>>, vector<1x16x128xbf16>
    %122 = vector.shape_cast %121 : vector<1x16x128xbf16> to vector<16x128xbf16>
    %123 = vector.shape_cast %119 : vector<16x128xbf16> to vector<1x16x128xbf16>
    tpu.vector_store %arg4[%120, %c0_51, %c0_52], %123 {strides = array<i32>} : memref<8x16x128xbf16, #tpu.memory_space<vmem>>, vector<1x16x128xbf16>,
    %c7_i32 = arith.constant 7 : i32
    %124 = arith.truncf %118 : vector<16x128xf32> to vector<16x128xbf16>
    %cst_53 = arith.constant dense<0.000000e+00> : vector<16x128xf32>
    %125 = tpu.matmul %124, %3, %cst_53 {dimension_numbers = #tpu.dot_dimension_numbers<[1], [0], [0], [1], [0, 0, 1, 1], [], []>} : vector<16x128xbf16>, vector<128x128xbf16>, vector<16x128xf32> -> vector<16x128xf32>
    %126 = arith.index_cast %c7_i32 : i32 to index
    %c0_54 = arith.constant 0 : index
    %c0_55 = arith.constant 0 : index
    %127 = vector.load %arg3[%126, %c0_54, %c0_55] : memref<8x16x128xbf16, #tpu.memory_space<vmem>>, vector<1x16x128xbf16>
    %128 = vector.shape_cast %127 : vector<1x16x128xbf16> to vector<16x128xbf16>
    %129 = arith.extf %128 : vector<16x128xbf16> to vector<16x128xf32>
    %130 = arith.addf %125, %129 : vector<16x128xf32>
    %cst_56 = arith.constant 8.000000e-01 : f32
    %131 = vector.broadcast %cst_56 : f32 to vector<16x128xf32>
    %132 = arith.mulf %131, %118 : vector<16x128xf32>
    %cst_57 = arith.constant 0.000000e+00 : f32
    %133 = vector.broadcast %cst_57 : f32 to vector<16x128xf32>
    %134 = arith.maximumf %130, %133 : vector<16x128xf32>
    %135 = arith.addf %132, %134 : vector<16x128xf32>
    %136 = arith.truncf %135 : vector<16x128xf32> to vector<16x128xbf16>
    %137 = arith.index_cast %c7_i32 : i32 to index
    %c0_58 = arith.constant 0 : index
    %c0_59 = arith.constant 0 : index
    %138 = vector.load %arg4[%137, %c0_58, %c0_59] : memref<8x16x128xbf16, #tpu.memory_space<vmem>>, vector<1x16x128xbf16>
    %139 = vector.shape_cast %138 : vector<1x16x128xbf16> to vector<16x128xbf16>
    %140 = vector.shape_cast %136 : vector<16x128xbf16> to vector<1x16x128xbf16>
    tpu.vector_store %arg4[%137, %c0_58, %c0_59], %140 {strides = array<i32>} : memref<8x16x128xbf16, #tpu.memory_space<vmem>>, vector<1x16x128xbf16>,
    %c8_i32 = arith.constant 8 : i32
    %c0_60 = arith.constant 0 : index
    %c0_61 = arith.constant 0 : index
    %141 = vector.load %arg5[%c0_60, %c0_61] : memref<16x128xf32, #tpu.memory_space<vmem>>, vector<16x128xf32>
    tpu.vector_store %arg5[%c0_60, %c0_61], %135 {strides = array<i32>} : memref<16x128xf32, #tpu.memory_space<vmem>>, vector<16x128xf32>,
    return
  }
  func.func @transform_0(%arg0: i32, %arg1: i32) -> (i32, i32) {
    %c0_i32 = arith.constant 0 : i32
    %c0_i32_0 = arith.constant 0 : i32
    %c0_i32_1 = arith.constant 0 : i32
    return %c0_i32, %c0_i32_0 : i32, i32
  }
  func.func @transform_1(%arg0: i32, %arg1: i32) -> (i32, i32, i32) {
    %c0_i32 = arith.constant 0 : i32
    %c0_i32_0 = arith.constant 0 : i32
    return %arg1, %arg0, %c0_i32 : i32, i32, i32
  }
  func.func @transform_2(%arg0: i32, %arg1: i32) -> (i32, i32, i32) {
    %c0_i32 = arith.constant 0 : i32
    %c0_i32_0 = arith.constant 0 : i32
    return %arg1, %arg0, %c0_i32 : i32, i32, i32
  }
}

</mosaic_0001>

<llo_original>
// kernel: _lambda_.1
$region0: #{_lambda_.1}
  #allocation0 [shape = 'u32[]', space=smem, size = 0x4, offset = 0x4, fixed_abs, tag = 'smem constant byte address 0x4 - core index']
  #allocation1 [shape = 'u32[144,128]{1,0:T(1,128)}', space=vmem, size = 0x12000, scoped, tag = 'internal scratch']
  #allocation2 [shape = 'f32[16,128]{1,0:T(8,128)}', space=vmem, size = 0x2000, scoped, tag = 'scratch operand']
  %s0 = inlined_call_operand.vmem [shape: bf16[128,128], index: 0, kind: input, shape index: {}]
  %s1 = inlined_call_operand.vmem [shape: bf16[8,16,128], index: 1, kind: input, shape index: {}]
  %s2 = inlined_call_operand.vmem [shape: bf16[8,16,128], index: 2, kind: output, shape index: {}]
  %s3 = sld [smem:[#allocation0]]
  $region22: #{_lambda_.1} parent=0
    _
  %s5 = ssub.s32 1, %s3
  %s6 = scalar_select 0, %s5, %s3
  // Predicated region
  $region2: #{_lambda_.1} parent=0 // pred_check
    _
  $region3: #{_lambda_.1} parent=0 // pred_check_branch
    %8 = sbr.rel (0) target = $region5
  $region4: #{_lambda_.1} parent=0 // pred_region
    _
  $region5: #{_lambda_.1} parent=0 // pred_fallthru
    _
  // Predicated region
  $region6: #{_lambda_.1} parent=0 // pred_check
    _
  $region7: #{_lambda_.1} parent=0 // pred_check_branch
    %10 = sbr.rel (0) target = $region9
  $region8: #{_lambda_.1} parent=0 // pred_region
    _
  $region9: #{_lambda_.1} parent=0 // pred_fallthru
    _
  %p12 = scmp.eq.s32.totalorder 0, 0
  // Predicated region
  $region10: #{_lambda_.1} parent=0 // pred_check
    %p13 = pneg %p12
  $region11: #{_lambda_.1} parent=0 // pred_check_branch
    %15 = sbr.rel (%p13) target = $region13
  $region12: #{_lambda_.1} parent=0 // pred_region
    %16 = vst [vmem:[#allocation2] sm:$0xff] 0.0
    %17 = vst [vmem:[#allocation2 + $0x8] sm:$0xff] 0.0
  $region13: #{_lambda_.1} parent=0 // pred_fallthru
    _
  %v18 = vld [vmem:[%s0] sm:$0xf]
  %v19 = vld [vmem:[%s0 + $0x4] sm:$0xf]
  %v20 = vld [vmem:[%s0 + $0x8] sm:$0xf]
  %v21 = vld [vmem:[%s0 + $0xc] sm:$0xf]
  %v22 = vld [vmem:[%s0 + $0x10] sm:$0xf]
  %v23 = vld [vmem:[%s0 + $0x14] sm:$0xf]
  %v24 = vld [vmem:[%s0 + $0x18] sm:$0xf]
  %v25 = vld [vmem:[%s0 + $0x1c] sm:$0xf]
  %v26 = vld [vmem:[%s0 + $0x20] sm:$0xf]
  %v27 = vld [vmem:[%s0 + $0x24] sm:$0xf]
  %v28 = vld [vmem:[%s0 + $0x28] sm:$0xf]
  %v29 = vld [vmem:[%s0 + $0x2c] sm:$0xf]
  %v30 = vld [vmem:[%s0 + $0x30] sm:$0xf]
  %v31 = vld [vmem:[%s0 + $0x34] sm:$0xf]
  %v32 = vld [vmem:[%s0 + $0x38] sm:$0xf]
  %v33 = vld [vmem:[%s0 + $0x3c] sm:$0xf]
  %v34 = vld [vmem:[#allocation2] sm:$0xff]
  %v35 = vld [vmem:[#allocation2 + $0x8] sm:$0xff]
  %v36 = vpack.c.bf16 %v35, %v34
  %v37 = vld [vmem:[%s1] sm:$0xf]
  %v38 = vld [vmem:[%s1 + $0x4] sm:$0xf]
  %v39 = vunpack.c.l.bf16 %v37
  %v40 = vunpack.c.l.bf16 %v38
  %v57 = vunpack.c.l.b16 %v18
  %v58 = vunpack.c.l.b16 %v19
  %v59 = vunpack.c.l.b16 %v20
  %v60 = vunpack.c.l.b16 %v21
  %v61 = vunpack.c.l.b16 %v22
  %v62 = vunpack.c.l.b16 %v23
  %v63 = vunpack.c.l.b16 %v24
  %v64 = vunpack.c.l.b16 %v25
  %v65 = vunpack.c.l.b16 %v26
  %v66 = vunpack.c.l.b16 %v27
  %v67 = vunpack.c.l.b16 %v28
  %v68 = vunpack.c.l.b16 %v29
  %v69 = vunpack.c.l.b16 %v30
  %v70 = vunpack.c.l.b16 %v31
  %v71 = vunpack.c.l.b16 %v32
  %v72 = vunpack.c.l.b16 %v33
  %v73 = vpack.c.b16 %v58, %v57
  %v74 = vpack.c.b16 %v60, %v59
  %v75 = vpack.c.b16 %v62, %v61
  %v76 = vpack.c.b16 %v64, %v63
  %v77 = vpack.c.b16 %v66, %v65
  %v78 = vpack.c.b16 %v68, %v67
  %v79 = vpack.c.b16 %v70, %v69
  %v80 = vpack.c.b16 %v72, %v71
  %89 = vmatprep.subr.bf16.mxu0 0
  %90 = vmatpush1.bf16.msra.mxu0 %v80
  %91 = vmatprep.subr.bf16.mxu0 0
  %92 = vmatpush1.bf16.msra.mxu0 %v79
  %93 = vmatprep.subr.bf16.mxu0 0
  %94 = vmatpush1.bf16.msra.mxu0 %v78
  %95 = vmatprep.subr.bf16.mxu0 0
  %96 = vmatpush1.bf16.msra.mxu0 %v77
  %97 = vmatprep.subr.bf16.mxu0 0
  %98 = vmatpush1.bf16.msra.mxu0 %v76
  %99 = vmatprep.subr.bf16.mxu0 0
  %100 = vmatpush1.bf16.msra.mxu0 %v75
  %101 = vmatprep.subr.bf16.mxu0 0
  %102 = vmatpush1.bf16.msra.mxu0 %v74
  %103 = vmatprep.subr.bf16.mxu0 0
  %104 = vmatpush1.bf16.msra.mxu0 %v73
  %105 = vmatprep.subr.bf16.mxu0 0
  %106 = vmatpush2.bf16.msra.mxu0 0
  %107 = vmatprep.subr.bf16.mxu0 0
  %108 = vmatpush2.bf16.msra.mxu0 0
  %109 = vmatprep.subr.bf16.mxu0 0
  %110 = vmatpush2.bf16.msra.mxu0 0
  %111 = vmatprep.subr.bf16.mxu0 0
  %112 = vmatpush2.bf16.msra.mxu0 0
  %113 = vmatprep.subr.bf16.mxu0 0
  %114 = vmatpush2.bf16.msra.mxu0 0
  %115 = vmatprep.subr.bf16.mxu0 0
  %116 = vmatpush2.bf16.msra.mxu0 0
  %117 = vmatprep.subr.bf16.mxu0 0
  %118 = vmatpush2.bf16.msra.mxu0 0
  %119 = vmatprep.subr.bf16.mxu0 0
  %120 = vmatpush2.bf16.msra.mxu0 0
  %121 = vmatprep.mubr.bf16.mxu0 0
  %122 = vmatmul.mubr.bf16.gmra.mxu0 %v36
  %v123 = vpop.f32.mrf.mxu0
  %v124 = vadd.f32 %v39, %v123
  %v125 = vpop.f32.mrf.mxu0
  %v126 = vpop.f32.mrf.mxu0
  %v127 = vadd.f32 %v40, %v126
  %v128 = vpop.f32.mrf.mxu0
  %129 = vdwg.mxu0
  %v130 = vmul.f32 %v34, 0.8
  %v131 = vmul.f32 %v35, 0.8
  %v132 = vmax.f32 %v124, 0.0
  %v133 = vmax.f32 %v127, 0.0
  %v134 = vadd.f32 %v130, %v132
  %v135 = vadd.f32 %v131, %v133
  %v136 = vpack.c.bf16 %v135, %v134
  %v138 = vunpack.c.l.b16 %v136
  %v139 = vunpack.c.h.b16 %v136
  %v140 = vpack.c.b16 %v138, %v138
  %v141 = vpack.c.b16 %v139, %v139
  %144 = vst [vmem:[%s2] sm:$0xf] %v140
  %145 = vst [vmem:[%s2 + $0x4] sm:$0xf] %v141
  %s146 = scalar_lea.vmem %s1, 8
  %v147 = vld [vmem:[%s146] sm:$0xf]
  %v148 = vld [vmem:[%s146 + $0x4] sm:$0xf]
  %v149 = vunpack.c.l.bf16 %v147
  %v150 = vunpack.c.l.bf16 %v148
  %151 = vmatprep.subr.bf16.mxu0 0
  %152 = vmatpush1.bf16.msra.mxu0 %v80
  %153 = vmatprep.subr.bf16.mxu0 0
  %154 = vmatpush1.bf16.msra.mxu0 %v79
  %155 = vmatprep.subr.bf16.mxu0 0
  %156 = vmatpush1.bf16.msra.mxu0 %v78
  %157 = vmatprep.subr.bf16.mxu0 0
  %158 = vmatpush1.bf16.msra.mxu0 %v77
  %159 = vmatprep.subr.bf16.mxu0 0
  %160 = vmatpush1.bf16.msra.mxu0 %v76
  %161 = vmatprep.subr.bf16.mxu0 0
  %162 = vmatpush1.bf16.msra.mxu0 %v75
  %163 = vmatprep.subr.bf16.mxu0 0
  %164 = vmatpush1.bf16.msra.mxu0 %v74
  %165 = vmatprep.subr.bf16.mxu0 0
  %166 = vmatpush1.bf16.msra.mxu0 %v73
  %167 = vmatprep.subr.bf16.mxu0 0
  %168 = vmatpush2.bf16.msra.mxu0 0
  %169 = vmatprep.subr.bf16.mxu0 0
  %170 = vmatpush2.bf16.msra.mxu0 0
  %171 = vmatprep.subr.bf16.mxu0 0
  %172 = vmatpush2.bf16.msra.mxu0 0
  %173 = vmatprep.subr.bf16.mxu0 0
  %174 = vmatpush2.bf16.msra.mxu0 0
  %175 = vmatprep.subr.bf16.mxu0 0
  %176 = vmatpush2.bf16.msra.mxu0 0
  %177 = vmatprep.subr.bf16.mxu0 0
  %178 = vmatpush2.bf16.msra.mxu0 0
  %179 = vmatprep.subr.bf16.mxu0 0
  %180 = vmatpush2.bf16.msra.mxu0 0
  %181 = vmatprep.subr.bf16.mxu0 0
  %182 = vmatpush2.bf16.msra.mxu0 0
  %183 = vmatprep.mubr.bf16.mxu0 0
  %184 = vmatmul.mubr.bf16.gmra.mxu0 %v136
  %v185 = vpop.f32.mrf.mxu0
  %v186 = vadd.f32 %v149, %v185
  %v187 = vpop.f32.mrf.mxu0
  %v188 = vpop.f32.mrf.mxu0
  %v189 = vadd.f32 %v150, %v188
  %v190 = vpop.f32.mrf.mxu0
  %191 = vdwg.mxu0
  %v192 = vmul.f32 %v134, 0.8
  %v193 = vmul.f32 %v135, 0.8
  %v194 = vmax.f32 %v186, 0.0
  %v195 = vmax.f32 %v189, 0.0
  %v196 = vadd.f32 %v192, %v194
  %v197 = vadd.f32 %v193, %v195
  %v198 = vpack.c.bf16 %v197, %v196
  %v200 = vunpack.c.l.b16 %v198
  %v201 = vunpack.c.h.b16 %v198
  %v202 = vpack.c.b16 %v200, %v200
  %v203 = vpack.c.b16 %v201, %v201
  %s206 = scalar_lea.vmem %s2, 8
  %207 = vst [vmem:[%s206] sm:$0xf] %v202
  %208 = vst [vmem:[%s206 + $0x4] sm:$0xf] %v203
  %s209 = scalar_lea.vmem %s1, 16
  %v210 = vld [vmem:[%s209] sm:$0xf]
  %v211 = vld [vmem:[%s209 + $0x4] sm:$0xf]
  %v212 = vunpack.c.l.bf16 %v210
  %v213 = vunpack.c.l.bf16 %v211
  %214 = vmatprep.subr.bf16.mxu0 0
  %215 = vmatpush1.bf16.msra.mxu0 %v80
  %216 = vmatprep.subr.bf16.mxu0 0
  %217 = vmatpush1.bf16.msra.mxu0 %v79
  %218 = vmatprep.subr.bf16.mxu0 0
  %219 = vmatpush1.bf16.msra.mxu0 %v78
  %220 = vmatprep.subr.bf16.mxu0 0
  %221 = vmatpush1.bf16.msra.mxu0 %v77
  %222 = vmatprep.subr.bf16.mxu0 0
  %223 = vmatpush1.bf16.msra.mxu0 %v76
  %224 = vmatprep.subr.bf16.mxu0 0
  %225 = vmatpush1.bf16.msra.mxu0 %v75
  %226 = vmatprep.subr.bf16.mxu0 0
  %227 = vmatpush1.bf16.msra.mxu0 %v74
  %228 = vmatprep.subr.bf16.mxu0 0
  %229 = vmatpush1.bf16.msra.mxu0 %v73
  %230 = vmatprep.subr.bf16.mxu0 0
  %231 = vmatpush2.bf16.msra.mxu0 0
  %232 = vmatprep.subr.bf16.mxu0 0
  %233 = vmatpush2.bf16.msra.mxu0 0
  %234 = vmatprep.subr.bf16.mxu0 0
  %235 = vmatpush2.bf16.msra.mxu0 0
  %236 = vmatprep.subr.bf16.mxu0 0
  %237 = vmatpush2.bf16.msra.mxu0 0
  %238 = vmatprep.subr.bf16.mxu0 0
  %239 = vmatpush2.bf16.msra.mxu0 0
  %240 = vmatprep.subr.bf16.mxu0 0
  %241 = vmatpush2.bf16.msra.mxu0 0
  %242 = vmatprep.subr.bf16.mxu0 0
  %243 = vmatpush2.bf16.msra.mxu0 0
  %244 = vmatprep.subr.bf16.mxu0 0
  %245 = vmatpush2.bf16.msra.mxu0 0
  %246 = vmatprep.mubr.bf16.mxu0 0
  %247 = vmatmul.mubr.bf16.gmra.mxu0 %v198
  %v248 = vpop.f32.mrf.mxu0
  %v249 = vadd.f32 %v212, %v248
  %v250 = vpop.f32.mrf.mxu0
  %v251 = vpop.f32.mrf.mxu0
  %v252 = vadd.f32 %v213, %v251
  %v253 = vpop.f32.mrf.mxu0
  %254 = vdwg.mxu0
  %v255 = vmul.f32 %v196, 0.8
  %v256 = vmul.f32 %v197, 0.8
  %v257 = vmax.f32 %v249, 0.0
  %v258 = vmax.f32 %v252, 0.0
  %v259 = vadd.f32 %v255, %v257
  %v260 = vadd.f32 %v256, %v258
  %v261 = vpack.c.bf16 %v260, %v259
  %v263 = vunpack.c.l.b16 %v261
  %v264 = vunpack.c.h.b16 %v261
  %v265 = vpack.c.b16 %v263, %v263
  %v266 = vpack.c.b16 %v264, %v264
  %s269 = scalar_lea.vmem %s2, 16
  %270 = vst [vmem:[%s269] sm:$0xf] %v265
  %271 = vst [vmem:[%s269 + $0x4] sm:$0xf] %v266
  %s272 = scalar_lea.vmem %s1, 24
  %v273 = vld [vmem:[%s272] sm:$0xf]
  %v274 = vld [vmem:[%s272 + $0x4] sm:$0xf]
  %v275 = vunpack.c.l.bf16 %v273
  %v276 = vunpack.c.l.bf16 %v274
  %277 = vmatprep.subr.bf16.mxu0 0
  %278 = vmatpush1.bf16.msra.mxu0 %v80
  %279 = vmatprep.subr.bf16.mxu0 0
  %280 = vmatpush1.bf16.msra.mxu0 %v79
  %281 = vmatprep.subr.bf16.mxu0 0
  %282 = vmatpush1.bf16.msra.mxu0 %v78
  %283 = vmatprep.subr.bf16.mxu0 0
  %284 = vmatpush1.bf16.msra.mxu0 %v77
  %285 = vmatprep.subr.bf16.mxu0 0
  %286 = vmatpush1.bf16.msra.mxu0 %v76
  %287 = vmatprep.subr.bf16.mxu0 0
  %288 = vmatpush1.bf16.msra.mxu0 %v75
  %289 = vmatprep.subr.bf16.mxu0 0
  %290 = vmatpush1.bf16.msra.mxu0 %v74
  %291 = vmatprep.subr.bf16.mxu0 0
  %292 = vmatpush1.bf16.msra.mxu0 %v73
  %293 = vmatprep.subr.bf16.mxu0 0
  %294 = vmatpush2.bf16.msra.mxu0 0
  %295 = vmatprep.subr.bf16.mxu0 0
  %296 = vmatpush2.bf16.msra.mxu0 0
  %297 = vmatprep.subr.bf16.mxu0 0
  %298 = vmatpush2.bf16.msra.mxu0 0
  %299 = vmatprep.subr.bf16.mxu0 0
  %300 = vmatpush2.bf16.msra.mxu0 0
  %301 = vmatprep.subr.bf16.mxu0 0
  %302 = vmatpush2.bf16.msra.mxu0 0
  %303 = vmatprep.subr.bf16.mxu0 0
  %304 = vmatpush2.bf16.msra.mxu0 0
  %305 = vmatprep.subr.bf16.mxu0 0
  %306 = vmatpush2.bf16.msra.mxu0 0
  %307 = vmatprep.subr.bf16.mxu0 0
  %308 = vmatpush2.bf16.msra.mxu0 0
  %309 = vmatprep.mubr.bf16.mxu0 0
  %310 = vmatmul.mubr.bf16.gmra.mxu0 %v261
  %v311 = vpop.f32.mrf.mxu0
  %v312 = vadd.f32 %v275, %v311
  %v313 = vpop.f32.mrf.mxu0
  %v314 = vpop.f32.mrf.mxu0
  %v315 = vadd.f32 %v276, %v314
  %v316 = vpop.f32.mrf.mxu0
  %317 = vdwg.mxu0
  %v318 = vmul.f32 %v259, 0.8
  %v319 = vmul.f32 %v260, 0.8
  %v320 = vmax.f32 %v312, 0.0
  %v321 = vmax.f32 %v315, 0.0
  %v322 = vadd.f32 %v318, %v320
  %v323 = vadd.f32 %v319, %v321
  %v324 = vpack.c.bf16 %v323, %v322
  %v326 = vunpack.c.l.b16 %v324
  %v327 = vunpack.c.h.b16 %v324
  %v328 = vpack.c.b16 %v326, %v326
  %v329 = vpack.c.b16 %v327, %v327
  %s332 = scalar_lea.vmem %s2, 24
  %333 = vst [vmem:[%s332] sm:$0xf] %v328
  %334 = vst [vmem:[%s332 + $0x4] sm:$0xf] %v329
  %s335 = scalar_lea.vmem %s1, 32
  %v336 = vld [vmem:[%s335] sm:$0xf]
  %v337 = vld [vmem:[%s335 + $0x4] sm:$0xf]
  %v338 = vunpack.c.l.bf16 %v336
  %v339 = vunpack.c.l.bf16 %v337
  %340 = vmatprep.subr.bf16.mxu0 0
  %341 = vmatpush1.bf16.msra.mxu0 %v80
  %342 = vmatprep.subr.bf16.mxu0 0
  %343 = vmatpush1.bf16.msra.mxu0 %v79
  %344 = vmatprep.subr.bf16.mxu0 0
  %345 = vmatpush1.bf16.msra.mxu0 %v78
  %346 = vmatprep.subr.bf16.mxu0 0
  %347 = vmatpush1.bf16.msra.mxu0 %v77
  %348 = vmatprep.subr.bf16.mxu0 0
  %349 = vmatpush1.bf16.msra.mxu0 %v76
  %350 = vmatprep.subr.bf16.mxu0 0
  %351 = vmatpush1.bf16.msra.mxu0 %v75
  %352 = vmatprep.subr.bf16.mxu0 0
  %353 = vmatpush1.bf16.msra.mxu0 %v74
  %354 = vmatprep.subr.bf16.mxu0 0
  %355 = vmatpush1.bf16.msra.mxu0 %v73
  %356 = vmatprep.subr.bf16.mxu0 0
  %357 = vmatpush2.bf16.msra.mxu0 0
  %358 = vmatprep.subr.bf16.mxu0 0
  %359 = vmatpush2.bf16.msra.mxu0 0
  %360 = vmatprep.subr.bf16.mxu0 0
  %361 = vmatpush2.bf16.msra.mxu0 0
  %362 = vmatprep.subr.bf16.mxu0 0
  %363 = vmatpush2.bf16.msra.mxu0 0
  %364 = vmatprep.subr.bf16.mxu0 0
  %365 = vmatpush2.bf16.msra.mxu0 0
  %366 = vmatprep.subr.bf16.mxu0 0
  %367 = vmatpush2.bf16.msra.mxu0 0
  %368 = vmatprep.subr.bf16.mxu0 0
  %369 = vmatpush2.bf16.msra.mxu0 0
  %370 = vmatprep.subr.bf16.mxu0 0
  %371 = vmatpush2.bf16.msra.mxu0 0
  %372 = vmatprep.mubr.bf16.mxu0 0
  %373 = vmatmul.mubr.bf16.gmra.mxu0 %v324
  %v374 = vpop.f32.mrf.mxu0
  %v375 = vadd.f32 %v338, %v374
  %v376 = vpop.f32.mrf.mxu0
  %v377 = vpop.f32.mrf.mxu0
  %v378 = vadd.f32 %v339, %v377
  %v379 = vpop.f32.mrf.mxu0
  %380 = vdwg.mxu0
  %v381 = vmul.f32 %v322, 0.8
  %v382 = vmul.f32 %v323, 0.8
  %v383 = vmax.f32 %v375, 0.0
  %v384 = vmax.f32 %v378, 0.0
  %v385 = vadd.f32 %v381, %v383
  %v386 = vadd.f32 %v382, %v384
  %v387 = vpack.c.bf16 %v386, %v385
  %v389 = vunpack.c.l.b16 %v387
  %v390 = vunpack.c.h.b16 %v387
  %v391 = vpack.c.b16 %v389, %v389
  %v392 = vpack.c.b16 %v390, %v390
  %s395 = scalar_lea.vmem %s2, 32
  %396 = vst [vmem:[%s395] sm:$0xf] %v391
  %397 = vst [vmem:[%s395 + $0x4] sm:$0xf] %v392
  %s398 = scalar_lea.vmem %s1, 40
  %v399 = vld [vmem:[%s398] sm:$0xf]
  %v400 = vld [vmem:[%s398 + $0x4] sm:$0xf]
  %v401 = vunpack.c.l.bf16 %v399
  %v402 = vunpack.c.l.bf16 %v400
  %403 = vmatprep.subr.bf16.mxu0 0
  %404 = vmatpush1.bf16.msra.mxu0 %v80
  %405 = vmatprep.subr.bf16.mxu0 0
  %406 = vmatpush1.bf16.msra.mxu0 %v79
  %407 = vmatprep.subr.bf16.mxu0 0
  %408 = vmatpush1.bf16.msra.mxu0 %v78
  %409 = vmatprep.subr.bf16.mxu0 0
  %410 = vmatpush1.bf16.msra.mxu0 %v77
  %411 = vmatprep.subr.bf16.mxu0 0
  %412 = vmatpush1.bf16.msra.mxu0 %v76
  %413 = vmatprep.subr.bf16.mxu0 0
  %414 = vmatpush1.bf16.msra.mxu0 %v75
  %415 = vmatprep.subr.bf16.mxu0 0
  %416 = vmatpush1.bf16.msra.mxu0 %v74
  %417 = vmatprep.subr.bf16.mxu0 0
  %418 = vmatpush1.bf16.msra.mxu0 %v73
  %419 = vmatprep.subr.bf16.mxu0 0
  %420 = vmatpush2.bf16.msra.mxu0 0
  %421 = vmatprep.subr.bf16.mxu0 0
  %422 = vmatpush2.bf16.msra.mxu0 0
  %423 = vmatprep.subr.bf16.mxu0 0
  %424 = vmatpush2.bf16.msra.mxu0 0
  %425 = vmatprep.subr.bf16.mxu0 0
  %426 = vmatpush2.bf16.msra.mxu0 0
  %427 = vmatprep.subr.bf16.mxu0 0
  %428 = vmatpush2.bf16.msra.mxu0 0
  %429 = vmatprep.subr.bf16.mxu0 0
  %430 = vmatpush2.bf16.msra.mxu0 0
  %431 = vmatprep.subr.bf16.mxu0 0
  %432 = vmatpush2.bf16.msra.mxu0 0
  %433 = vmatprep.subr.bf16.mxu0 0
  %434 = vmatpush2.bf16.msra.mxu0 0
  %435 = vmatprep.mubr.bf16.mxu0 0
  %436 = vmatmul.mubr.bf16.gmra.mxu0 %v387
  %v437 = vpop.f32.mrf.mxu0
  %v438 = vadd.f32 %v401, %v437
  %v439 = vpop.f32.mrf.mxu0
  %v440 = vpop.f32.mrf.mxu0
  %v441 = vadd.f32 %v402, %v440
  %v442 = vpop.f32.mrf.mxu0
  %443 = vdwg.mxu0
  %v444 = vmul.f32 %v385, 0.8
  %v445 = vmul.f32 %v386, 0.8
  %v446 = vmax.f32 %v438, 0.0
  %v447 = vmax.f32 %v441, 0.0
  %v448 = vadd.f32 %v444, %v446
  %v449 = vadd.f32 %v445, %v447
  %v450 = vpack.c.bf16 %v449, %v448
  %v452 = vunpack.c.l.b16 %v450
  %v453 = vunpack.c.h.b16 %v450
  %v454 = vpack.c.b16 %v452, %v452
  %v455 = vpack.c.b16 %v453, %v453
  %s458 = scalar_lea.vmem %s2, 40
  %459 = vst [vmem:[%s458] sm:$0xf] %v454
  %460 = vst [vmem:[%s458 + $0x4] sm:$0xf] %v455
  %s461 = scalar_lea.vmem %s1, 48
  %v462 = vld [vmem:[%s461] sm:$0xf]
  %v463 = vld [vmem:[%s461 + $0x4] sm:$0xf]
  %v464 = vunpack.c.l.bf16 %v462
  %v465 = vunpack.c.l.bf16 %v463
  %466 = vmatprep.subr.bf16.mxu0 0
  %467 = vmatpush1.bf16.msra.mxu0 %v80
  %468 = vmatprep.subr.bf16.mxu0 0
  %469 = vmatpush1.bf16.msra.mxu0 %v79
  %470 = vmatprep.subr.bf16.mxu0 0
  %471 = vmatpush1.bf16.msra.mxu0 %v78
  %472 = vmatprep.subr.bf16.mxu0 0
  %473 = vmatpush1.bf16.msra.mxu0 %v77
  %474 = vmatprep.subr.bf16.mxu0 0
  %475 = vmatpush1.bf16.msra.mxu0 %v76
  %476 = vmatprep.subr.bf16.mxu0 0
  %477 = vmatpush1.bf16.msra.mxu0 %v75
  %478 = vmatprep.subr.bf16.mxu0 0
  %479 = vmatpush1.bf16.msra.mxu0 %v74
  %480 = vmatprep.subr.bf16.mxu0 0
  %481 = vmatpush1.bf16.msra.mxu0 %v73
  %482 = vmatprep.subr.bf16.mxu0 0
  %483 = vmatpush2.bf16.msra.mxu0 0
  %484 = vmatprep.subr.bf16.mxu0 0
  %485 = vmatpush2.bf16.msra.mxu0 0
  %486 = vmatprep.subr.bf16.mxu0 0
  %487 = vmatpush2.bf16.msra.mxu0 0
  %488 = vmatprep.subr.bf16.mxu0 0
  %489 = vmatpush2.bf16.msra.mxu0 0
  %490 = vmatprep.subr.bf16.mxu0 0
  %491 = vmatpush2.bf16.msra.mxu0 0
  %492 = vmatprep.subr.bf16.mxu0 0
  %493 = vmatpush2.bf16.msra.mxu0 0
  %494 = vmatprep.subr.bf16.mxu0 0
  %495 = vmatpush2.bf16.msra.mxu0 0
  %496 = vmatprep.subr.bf16.mxu0 0
  %497 = vmatpush2.bf16.msra.mxu0 0
  %498 = vmatprep.mubr.bf16.mxu0 0
  %499 = vmatmul.mubr.bf16.gmra.mxu0 %v450
  %v500 = vpop.f32.mrf.mxu0
  %v501 = vadd.f32 %v464, %v500
  %v502 = vpop.f32.mrf.mxu0
  %v503 = vpop.f32.mrf.mxu0
  %v504 = vadd.f32 %v465, %v503
  %v505 = vpop.f32.mrf.mxu0
  %506 = vdwg.mxu0
  %v507 = vmul.f32 %v448, 0.8
  %v508 = vmul.f32 %v449, 0.8
  %v509 = vmax.f32 %v501, 0.0
  %v510 = vmax.f32 %v504, 0.0
  %v511 = vadd.f32 %v507, %v509
  %v512 = vadd.f32 %v508, %v510
  %v513 = vpack.c.bf16 %v512, %v511
  %v515 = vunpack.c.l.b16 %v513
  %v516 = vunpack.c.h.b16 %v513
  %v517 = vpack.c.b16 %v515, %v515
  %v518 = vpack.c.b16 %v516, %v516
  %s521 = scalar_lea.vmem %s2, 48
  %522 = vst [vmem:[%s521] sm:$0xf] %v517
  %523 = vst [vmem:[%s521 + $0x4] sm:$0xf] %v518
  %s524 = scalar_lea.vmem %s1, 56
  %v525 = vld [vmem:[%s524] sm:$0xf]
  %v526 = vld [vmem:[%s524 + $0x4] sm:$0xf]
  %v527 = vunpack.c.l.bf16 %v525
  %v528 = vunpack.c.l.bf16 %v526
  %529 = vmatprep.subr.bf16.mxu0 0
  %530 = vmatpush1.bf16.msra.mxu0 %v80
  %531 = vmatprep.subr.bf16.mxu0 0
  %532 = vmatpush1.bf16.msra.mxu0 %v79
  %533 = vmatprep.subr.bf16.mxu0 0
  %534 = vmatpush1.bf16.msra.mxu0 %v78
  %535 = vmatprep.subr.bf16.mxu0 0
  %536 = vmatpush1.bf16.msra.mxu0 %v77
  %537 = vmatprep.subr.bf16.mxu0 0
  %538 = vmatpush1.bf16.msra.mxu0 %v76
  %539 = vmatprep.subr.bf16.mxu0 0
  %540 = vmatpush1.bf16.msra.mxu0 %v75
  %541 = vmatprep.subr.bf16.mxu0 0
  %542 = vmatpush1.bf16.msra.mxu0 %v74
  %543 = vmatprep.subr.bf16.mxu0 0
  %544 = vmatpush1.bf16.msra.mxu0 %v73
  %545 = vmatprep.subr.bf16.mxu0 0
  %546 = vmatpush2.bf16.msra.mxu0 0
  %547 = vmatprep.subr.bf16.mxu0 0
  %548 = vmatpush2.bf16.msra.mxu0 0
  %549 = vmatprep.subr.bf16.mxu0 0
  %550 = vmatpush2.bf16.msra.mxu0 0
  %551 = vmatprep.subr.bf16.mxu0 0
  %552 = vmatpush2.bf16.msra.mxu0 0
  %553 = vmatprep.subr.bf16.mxu0 0
  %554 = vmatpush2.bf16.msra.mxu0 0
  %555 = vmatprep.subr.bf16.mxu0 0
  %556 = vmatpush2.bf16.msra.mxu0 0
  %557 = vmatprep.subr.bf16.mxu0 0
  %558 = vmatpush2.bf16.msra.mxu0 0
  %559 = vmatprep.subr.bf16.mxu0 0
  %560 = vmatpush2.bf16.msra.mxu0 0
  %561 = vmatprep.mubr.bf16.mxu0 0
  %562 = vmatmul.mubr.bf16.gmra.mxu0 %v513
  %v563 = vpop.f32.mrf.mxu0
  %v564 = vadd.f32 %v527, %v563
  %v565 = vpop.f32.mrf.mxu0
  %v566 = vpop.f32.mrf.mxu0
  %v567 = vadd.f32 %v528, %v566
  %v568 = vpop.f32.mrf.mxu0
  %569 = vdwg.mxu0
  %v570 = vmul.f32 %v511, 0.8
  %v571 = vmul.f32 %v512, 0.8
  %v572 = vmax.f32 %v564, 0.0
  %v573 = vmax.f32 %v567, 0.0
  %v574 = vadd.f32 %v570, %v572
  %v575 = vadd.f32 %v571, %v573
  %v576 = vpack.c.bf16 %v575, %v574
  %v578 = vunpack.c.l.b16 %v576
  %v579 = vunpack.c.h.b16 %v576
  %v580 = vpack.c.b16 %v578, %v578
  %v581 = vpack.c.b16 %v579, %v579
  %s584 = scalar_lea.vmem %s2, 56
  %585 = vst [vmem:[%s584] sm:$0xf] %v580
  %586 = vst [vmem:[%s584 + $0x4] sm:$0xf] %v581
  %587 = vst [vmem:[#allocation2] sm:$0xff] %v574
  %588 = vst [vmem:[#allocation2 + $0x8] sm:$0xff] %v575
  // Predicated region
  $region14: #{_lambda_.1} parent=0 // pred_check
    _
  $region15: #{_lambda_.1} parent=0 // pred_check_branch
    %590 = sbr.rel (0) target = $region17
  $region16: #{_lambda_.1} parent=0 // pred_region
    _
  $region17: #{_lambda_.1} parent=0 // pred_fallthru
    _
  // Predicated region
  $region18: #{_lambda_.1} parent=0 // pred_check
    _
  $region19: #{_lambda_.1} parent=0 // pred_check_branch
    %592 = sbr.rel (0) target = $region21
  $region20: #{_lambda_.1} parent=0 // pred_region
    _
  $region21: #{_lambda_.1} parent=0 // pred_fallthru
    _

</llo_original>
